<compile_context>
chip_gen: v7x
topology: tpu7x:2x2x1
jax: 0.10.0
libtpu: 0.0.40
codegen_flags: <defaults>
</compile_context>

<pallas_src>
import functools

import jax
import jax.numpy as jnp
from jax import lax
from jax.experimental import pallas as pl
from jax.experimental.pallas import tpu as pltpu

_LANE = 128
_SUBLANE = 8


def _round_up(x, m):
    return ((x + m - 1) // m) * m


def _vmem_capacity_bytes():
    try:
        return int(pltpu.get_tpu_info().vmem_capacity_bytes)
    except Exception:
        return 64 << 20  # conservative fallback: v7x per-TensorCore physical VMEM


def _has_bf16_vector_units():
    # v6e/v7x have bf16 VPU/EUP; v5e and older do not.
    try:
        kind = jax.devices()[0].device_kind.lower()
    except Exception:
        return False
    return ("v6" in kind) or ("v7" in kind)


def _head_kernel(x_ref, w1_ref, b1_ref, w2_ref, b2_ref, o_ref, *, act_dtype):
    # x:  (tb, H)                  w1: (H, H)    PyTorch (out, in) layout
    # b1: (1, H)  f32              w2: (Lp, H)   PyTorch (out, in) layout, Lp = pad(L, 128)
    # b2: (1, Lp) f32              o:  (tb, Lp)
    x = x_ref[...].astype(w1_ref.dtype)  # in-VMEM cast (no-op if producer emits bf16)

    # h = x @ w1.T -> contract axis 1 of x with axis 1 of w1 (no transpose emitted).
    h = lax.dot_general(x, w1_ref[...], (((1,), (1,)), ((), ())),
                        preferred_element_type=jnp.float32)
    # Bias-add in f32; tanh in act_dtype (bf16 on v6e/v7x halves VPU/EUP + vreg
    # pressure on the (tb, H) intermediate; f32 on v5e / f32-param path).
    h = jnp.tanh((h + b1_ref[...]).astype(act_dtype))

    h = h.astype(w2_ref.dtype)
    out = lax.dot_general(h, w2_ref[...], (((1,), (1,)), ((), ())),
                          preferred_element_type=jnp.float32)
    o_ref[...] = (out + b2_ref[...]).astype(o_ref.dtype)


def prepare_head_params(w_dense, b_dense, w_out, b_out, *, param_dtype=jnp.bfloat16):
    """One-time parameter prep (call at load time, NOT per forward call).

    Keeps the PyTorch (out, in) weight layout, casts weights to `param_dtype`,
    pads the label dimension to a multiple of 128 lanes, keeps biases in f32.
    """
    H = w_dense.shape[0]
    L = w_out.shape[0]
    L_pad = _round_up(L, _LANE)

    w1 = jnp.asarray(w_dense, param_dtype)                                   # (H, H)
    b1 = jnp.asarray(b_dense, jnp.float32).reshape(1, H)                     # (1, H)
    w2 = jnp.zeros((L_pad, H), param_dtype).at[:L, :].set(
        jnp.asarray(w_out, param_dtype))                                     # (Lp, H)
    b2 = jnp.zeros((1, L_pad), jnp.float32).at[:, :L].set(
        jnp.asarray(b_out, jnp.float32))                                     # (1, Lp)
    return (w1, b1, w2, b2, L)


def classification_head(x, params, *, block_b=512):
    """Fused ClassificationHead forward (eval mode).

    x: (B, H) activations (f32 or bf16 -- pass bf16 if the producer emits it; the
       cast to the weight dtype happens in VMEM, never in the wrapper).
    params: output of prepare_head_params().
    """
    w1, b1, w2, b2, num_labels = params
    B, H = x.shape
    L_pad = w2.shape[0]
    out_dtype = x.dtype

    # ---- batch tiling --------------------------------------------------------
    # Small batches: one full-batch tile (launch-overhead bound anyway).
    # Larger batches: big sublane(8)-aligned tiles (amortize ~0.35us/step), but at
    # least 2 grid steps so "parallel" can shard over v7x's two TensorCores.
    # The last tile may be ragged: no wrapper-side pad (would cost a full extra HBM
    # round trip); garbage rows are row-local and never written back.
    if B <= 16:
        tb = B
    else:
        tb = max(_SUBLANE, min(block_b, _round_up(pl.cdiv(B, 2), _SUBLANE)))
    grid_b = pl.cdiv(B, tb)

    xb = jnp.dtype(x.dtype).itemsize
    pb = jnp.dtype(w1.dtype).itemsize
    ob = jnp.dtype(out_dtype).itemsize
    vmem_cap = _vmem_capacity_bytes()

    act_dtype = (jnp.bfloat16
                 if (w1.dtype == jnp.bfloat16 and _has_bf16_vector_units())
                 else jnp.float32)

    def build(single_buffer_weights):
        wbuf = 1 if single_buffer_weights else 2
        # Blocks + kernel-internal intermediates + headroom; biases pad to 8 sublanes.
        resident = (
            2 * tb * H * xb                                   # double-buffered x tiles
            + 2 * tb * L_pad * ob                             # double-buffered out tiles
            + wbuf * (H * H + L_pad * H) * pb                 # resident w1, w2
            + wbuf * (_SUBLANE * H + _SUBLANE * L_pad) * 4    # resident b1, b2 (8 sublanes)
            + tb * H * (4 + pb)                               # f32 h + weight-dtype copy
            + tb * L_pad * 4                                  # f32 accumulator pre-cast
        )
        vmem_limit = int(min(max(resident * 5 // 4 + (2 << 20), 4 << 20),
                             (vmem_cap * 3) // 4))

        def wspec(shape):
            if single_buffer_weights:
                return pl.BlockSpec(shape, lambda i: (0, 0),
                                    pipeline_mode=pl.Buffered(1))
            return pl.BlockSpec(shape, lambda i: (0, 0))

        return pl.pallas_call(
            functools.partial(_head_kernel, act_dtype=act_dtype),
            out_shape=jax.ShapeDtypeStruct((B, L_pad), out_dtype),
            grid=(grid_b,),
            in_specs=[
                pl.BlockSpec((tb, H), lambda i: (i, 0)),   # x: batch-tiled HBM stream
                wspec((H, H)),                             # w1: VMEM-resident
                wspec((1, H)),                             # b1: VMEM-resident
                wspec((L_pad, H)),                         # w2: VMEM-resident (lane-padded)
                wspec((1, L_pad)),                         # b2: VMEM-resident
            ],
            out_specs=pl.BlockSpec((tb, L_pad), lambda i: (i, 0)),  # lane-dense store
            compiler_params=pltpu.CompilerParams(
                dimension_semantics=("parallel",),  # shard batch over TCs on v7x
                vmem_limit_bytes=vmem_limit,
            ),
        )

    try:
        out = build(single_buffer_weights=True)(x, w1, b1, w2, b2)
    except Exception:
        # Fallback for JAX builds without single-buffer pipeline_mode support.
        out = build(single_buffer_weights=False)(x, w1, b1, w2, b2)

    return out[:, :num_labels]


if __name__ == "__main__":
    # config.hidden_size = 32, num_labels = 4, batch = 8
    B, H, L = 8, 32, 4
    key = jax.random.PRNGKey(0)
    kx, kw1, kb1, kw2, kb2 = jax.random.split(key, 5)

    x = jax.random.normal(kx, (B, H), dtype=jnp.float32)
    # PyTorch nn.Linear weight layout: (out_features, in_features).
    w_dense = jax.random.normal(kw1, (H, H), dtype=jnp.float32) * 0.05
    b_dense = jax.random.normal(kb1, (H,), dtype=jnp.float32) * 0.05
    w_out = jax.random.normal(kw2, (L, H), dtype=jnp.float32) * 0.05
    b_out = jax.random.normal(kb2, (L,), dtype=jnp.float32) * 0.05

    # Pure-JAX reference (PyTorch eval forward: dropout is identity).
    ref = jnp.tanh(x @ w_dense.T + b_dense) @ w_out.T + b_out

    # f32 parameter path: matches the PyTorch forward tightly.
    params_f32 = prepare_head_params(w_dense, b_dense, w_out, b_out,
                                     param_dtype=jnp.float32)
    out_f32 = jax.block_until_ready(classification_head(x, params_f32))
    assert out_f32.shape == (B, L)
    assert jnp.allclose(out_f32, ref, atol=1e-5, rtol=1e-5)

    # bf16 weight path (default; halves dominant HBM traffic), f32 accumulation.
    params_bf16 = prepare_head_params(w_dense, b_dense, w_out, b_out,
                                      param_dtype=jnp.bfloat16)
    out_bf16 = jax.block_until_ready(classification_head(x, params_bf16))
    assert out_bf16.shape == (B, L)
    assert jnp.allclose(out_bf16, ref, atol=2e-2, rtol=2e-2)

    # Multi-step grid + ragged last tile path (>= 2 grid steps, no wrapper pad).
    B2 = 300
    x2 = jax.random.normal(kx, (B2, H), dtype=jnp.float32)
    ref2 = jnp.tanh(x2 @ w_dense.T + b_dense) @ w_out.T + b_out
    out2 = jax.block_until_ready(classification_head(x2, params_f32))
    assert out2.shape == (B2, L)
    assert jnp.allclose(out2, ref2, atol=1e-5, rtol=1e-5)

    print("KERNEL_OK")
</pallas_src>

<mosaic_0001>
module attributes {stable_mosaic.version = 11 : i64} {
  func.func @_head_kernel(%arg0: i32, %arg1: memref<8x32xf32, #tpu.memory_space<vmem>>, %arg2: memref<32x32xf32, #tpu.memory_space<vmem>>, %arg3: memref<1x32xf32, #tpu.memory_space<vmem>>, %arg4: memref<128x32xf32, #tpu.memory_space<vmem>>, %arg5: memref<1x128xf32, #tpu.memory_space<vmem>>, %arg6: memref<8x128xf32, #tpu.memory_space<vmem>>) attributes {dimension_semantics = [#tpu.dimension_semantics<parallel>], iteration_bounds = array<i64: 1>, scalar_prefetch = 0 : i64, scratch_operands = 0 : i64, tpu.core_type = #tpu.core_type<tc>, window_params = [{transform_indices = @transform_0, window_bounds = array<i64: 8, 32>}, {pipeline_mode = #tpu.pipeline_mode<synchronous>, transform_indices = @transform_1, window_bounds = array<i64: 32, 32>}, {pipeline_mode = #tpu.pipeline_mode<synchronous>, transform_indices = @transform_2, window_bounds = array<i64: 1, 32>}, {pipeline_mode = #tpu.pipeline_mode<synchronous>, transform_indices = @transform_3, window_bounds = array<i64: 128, 32>}, {pipeline_mode = #tpu.pipeline_mode<synchronous>, transform_indices = @transform_4, window_bounds = array<i64: 1, 128>}, {transform_indices = @transform_5, window_bounds = array<i64: 8, 128>}]} {
    %c0 = arith.constant 0 : index
    %c0_0 = arith.constant 0 : index
    %0 = vector.load %arg1[%c0, %c0_0] : memref<8x32xf32, #tpu.memory_space<vmem>>, vector<8x32xf32>
    %c0_1 = arith.constant 0 : index
    %c0_2 = arith.constant 0 : index
    %1 = vector.load %arg2[%c0_1, %c0_2] : memref<32x32xf32, #tpu.memory_space<vmem>>, vector<32x32xf32>
    %cst = arith.constant dense<0.000000e+00> : vector<8x32xf32>
    %2 = tpu.matmul %0, %1, %cst {dimension_numbers = #tpu.dot_dimension_numbers<[1], [1], [0], [0], [0, 0, 1, 0], [], []>} : vector<8x32xf32>, vector<32x32xf32>, vector<8x32xf32> -> vector<8x32xf32>
    %c0_3 = arith.constant 0 : index
    %c0_4 = arith.constant 0 : index
    %3 = vector.load %arg3[%c0_3, %c0_4] : memref<1x32xf32, #tpu.memory_space<vmem>>, vector<1x32xf32>
    %4 = vector.broadcast %3 : vector<1x32xf32> to vector<8x32xf32>
    %5 = arith.addf %2, %4 : vector<8x32xf32>
    %6 = math.tanh %5 : vector<8x32xf32>
    %c0_5 = arith.constant 0 : index
    %c0_6 = arith.constant 0 : index
    %7 = vector.load %arg4[%c0_5, %c0_6] : memref<128x32xf32, #tpu.memory_space<vmem>>, vector<128x32xf32>
    %cst_7 = arith.constant dense<0.000000e+00> : vector<8x128xf32>
    %8 = tpu.matmul %6, %7, %cst_7 {dimension_numbers = #tpu.dot_dimension_numbers<[1], [1], [0], [0], [0, 0, 1, 0], [], []>} : vector<8x32xf32>, vector<128x32xf32>, vector<8x128xf32> -> vector<8x128xf32>
    %c0_8 = arith.constant 0 : index
    %c0_9 = arith.constant 0 : index
    %9 = vector.load %arg5[%c0_8, %c0_9] : memref<1x128xf32, #tpu.memory_space<vmem>>, vector<1x128xf32>
    %10 = vector.broadcast %9 : vector<1x128xf32> to vector<8x128xf32>
    %11 = arith.addf %8, %10 : vector<8x128xf32>
    %c0_10 = arith.constant 0 : index
    %c0_11 = arith.constant 0 : index
    %12 = vector.load %arg6[%c0_10, %c0_11] : memref<8x128xf32, #tpu.memory_space<vmem>>, vector<8x128xf32>
    tpu.vector_store %arg6[%c0_10, %c0_11], %11 {strides = array<i32>} : memref<8x128xf32, #tpu.memory_space<vmem>>, vector<8x128xf32>,
    return
  }
  func.func @transform_0(%arg0: i32) -> (i32, i32) {
    %c0_i32 = arith.constant 0 : i32
    %c0_i32_0 = arith.constant 0 : i32
    return %arg0, %c0_i32 : i32, i32
  }
  func.func @transform_1(%arg0: i32) -> (i32, i32) {
    %c0_i32 = arith.constant 0 : i32
    %c0_i32_0 = arith.constant 0 : i32
    %c0_i32_1 = arith.constant 0 : i32
    return %c0_i32, %c0_i32_0 : i32, i32
  }
  func.func @transform_2(%arg0: i32) -> (i32, i32) {
    %c0_i32 = arith.constant 0 : i32
    %c0_i32_0 = arith.constant 0 : i32
    %c0_i32_1 = arith.constant 0 : i32
    return %c0_i32, %c0_i32_0 : i32, i32
  }
  func.func @transform_3(%arg0: i32) -> (i32, i32) {
    %c0_i32 = arith.constant 0 : i32
    %c0_i32_0 = arith.constant 0 : i32
    %c0_i32_1 = arith.constant 0 : i32
    return %c0_i32, %c0_i32_0 : i32, i32
  }
  func.func @transform_4(%arg0: i32) -> (i32, i32) {
    %c0_i32 = arith.constant 0 : i32
    %c0_i32_0 = arith.constant 0 : i32
    %c0_i32_1 = arith.constant 0 : i32
    return %c0_i32, %c0_i32_0 : i32, i32
  }
  func.func @transform_5(%arg0: i32) -> (i32, i32) {
    %c0_i32 = arith.constant 0 : i32
    %c0_i32_0 = arith.constant 0 : i32
    return %arg0, %c0_i32 : i32, i32
  }
}

module attributes {stable_mosaic.version = 11 : i64} {
  func.func @_head_kernel(%arg0: i32, %arg1: memref<8x32xf32, #tpu.memory_space<vmem>>, %arg2: memref<32x32xf32, #tpu.memory_space<vmem>>, %arg3: memref<1x32xf32, #tpu.memory_space<vmem>>, %arg4: memref<128x32xf32, #tpu.memory_space<vmem>>, %arg5: memref<1x128xf32, #tpu.memory_space<vmem>>, %arg6: memref<8x128xf32, #tpu.memory_space<vmem>>) attributes {dimension_semantics = [#tpu.dimension_semantics<parallel>], iteration_bounds = array<i64: 1>, scalar_prefetch = 0 : i64, scratch_operands = 0 : i64, tpu.core_type = #tpu.core_type<tc>, window_params = [{transform_indices = @transform_0, window_bounds = array<i64: 8, 32>}, {pipeline_mode = #tpu.pipeline_mode<synchronous>, transform_indices = @transform_1, window_bounds = array<i64: 32, 32>}, {pipeline_mode = #tpu.pipeline_mode<synchronous>, transform_indices = @transform_2, window_bounds = array<i64: 1, 32>}, {pipeline_mode = #tpu.pipeline_mode<synchronous>, transform_indices = @transform_3, window_bounds = array<i64: 128, 32>}, {pipeline_mode = #tpu.pipeline_mode<synchronous>, transform_indices = @transform_4, window_bounds = array<i64: 1, 128>}, {transform_indices = @transform_5, window_bounds = array<i64: 8, 128>}]} {
    %c0 = arith.constant 0 : index
    %c0_0 = arith.constant 0 : index
    %0 = vector.load %arg1[%c0, %c0_0] : memref<8x32xf32, #tpu.memory_space<vmem>>, vector<8x32xf32>
    %c0_1 = arith.constant 0 : index
    %c0_2 = arith.constant 0 : index
    %1 = vector.load %arg2[%c0_1, %c0_2] : memref<32x32xf32, #tpu.memory_space<vmem>>, vector<32x32xf32>
    %cst = arith.constant dense<0.000000e+00> : vector<8x32xf32>
    %2 = tpu.matmul %0, %1, %cst {dimension_numbers = #tpu.dot_dimension_numbers<[1], [1], [0], [0], [0, 0, 1, 0], [], []>} : vector<8x32xf32>, vector<32x32xf32>, vector<8x32xf32> -> vector<8x32xf32>
    %c0_3 = arith.constant 0 : index
    %c0_4 = arith.constant 0 : index
    %3 = vector.load %arg3[%c0_3, %c0_4] : memref<1x32xf32, #tpu.memory_space<vmem>>, vector<1x32xf32>
    %4 = vector.broadcast %3 : vector<1x32xf32> to vector<8x32xf32>
    %5 = arith.addf %2, %4 : vector<8x32xf32>
    %6 = math.tanh %5 : vector<8x32xf32>
    %c0_5 = arith.constant 0 : index
    %c0_6 = arith.constant 0 : index
    %7 = vector.load %arg4[%c0_5, %c0_6] : memref<128x32xf32, #tpu.memory_space<vmem>>, vector<128x32xf32>
    %cst_7 = arith.constant dense<0.000000e+00> : vector<8x128xf32>
    %8 = tpu.matmul %6, %7, %cst_7 {dimension_numbers = #tpu.dot_dimension_numbers<[1], [1], [0], [0], [0, 0, 1, 0], [], []>} : vector<8x32xf32>, vector<128x32xf32>, vector<8x128xf32> -> vector<8x128xf32>
    %c0_8 = arith.constant 0 : index
    %c0_9 = arith.constant 0 : index
    %9 = vector.load %arg5[%c0_8, %c0_9] : memref<1x128xf32, #tpu.memory_space<vmem>>, vector<1x128xf32>
    %10 = vector.broadcast %9 : vector<1x128xf32> to vector<8x128xf32>
    %11 = arith.addf %8, %10 : vector<8x128xf32>
    %c0_10 = arith.constant 0 : index
    %c0_11 = arith.constant 0 : index
    %12 = vector.load %arg6[%c0_10, %c0_11] : memref<8x128xf32, #tpu.memory_space<vmem>>, vector<8x128xf32>
    tpu.vector_store %arg6[%c0_10, %c0_11], %11 {strides = array<i32>} : memref<8x128xf32, #tpu.memory_space<vmem>>, vector<8x128xf32>,
    return
  }
  func.func @transform_0(%arg0: i32) -> (i32, i32) {
    %c0_i32 = arith.constant 0 : i32
    %c0_i32_0 = arith.constant 0 : i32
    return %arg0, %c0_i32 : i32, i32
  }
  func.func @transform_1(%arg0: i32) -> (i32, i32) {
    %c0_i32 = arith.constant 0 : i32
    %c0_i32_0 = arith.constant 0 : i32
    %c0_i32_1 = arith.constant 0 : i32
    return %c0_i32, %c0_i32_0 : i32, i32
  }
  func.func @transform_2(%arg0: i32) -> (i32, i32) {
    %c0_i32 = arith.constant 0 : i32
    %c0_i32_0 = arith.constant 0 : i32
    %c0_i32_1 = arith.constant 0 : i32
    return %c0_i32, %c0_i32_0 : i32, i32
  }
  func.func @transform_3(%arg0: i32) -> (i32, i32) {
    %c0_i32 = arith.constant 0 : i32
    %c0_i32_0 = arith.constant 0 : i32
    %c0_i32_1 = arith.constant 0 : i32
    return %c0_i32, %c0_i32_0 : i32, i32
  }
  func.func @transform_4(%arg0: i32) -> (i32, i32) {
    %c0_i32 = arith.constant 0 : i32
    %c0_i32_0 = arith.constant 0 : i32
    %c0_i32_1 = arith.constant 0 : i32
    return %c0_i32, %c0_i32_0 : i32, i32
  }
  func.func @transform_5(%arg0: i32) -> (i32, i32) {
    %c0_i32 = arith.constant 0 : i32
    %c0_i32_0 = arith.constant 0 : i32
    return %arg0, %c0_i32 : i32, i32
  }
}

</mosaic_0001>

<llo_original>
// kernel: tpu_custom_call.1
$region0: #{tpu_custom_call.1}
  #allocation0 [shape = 'u32[]', space=smem, size = 0x4, offset = 0x4, fixed_abs, tag = 'smem constant byte address 0x4 - core index']
  #allocation1 [shape = 'u32[144,128]{1,0:T(1,128)}', space=vmem, size = 0x12000, scoped, tag = 'internal scratch']
  %s0 = inlined_call_operand.vmem [shape: f32[8,32], index: 0, kind: input, shape index: {}]
  %s1 = inlined_call_operand.vmem [shape: f32[32,32], index: 1, kind: input, shape index: {}]
  %s2 = inlined_call_operand.vmem [shape: f32[1,32], index: 2, kind: input, shape index: {}]
  %s3 = inlined_call_operand.vmem [shape: f32[128,32], index: 3, kind: input, shape index: {}]
  %s4 = inlined_call_operand.vmem [shape: f32[1,128], index: 4, kind: input, shape index: {}]
  %s5 = inlined_call_operand.hbm [shape: f32[8,128], index: 5, kind: output, shape index: {}]
  %s6 = sld [smem:[#allocation0]]
  $region30: #{tpu_custom_call.1} parent=0
    _
  %s8 = ssub.s32 1, %s6
  %s9 = scalar_select 0, %s8, %s6
  $region1: #{tpu_custom_call.1} parent=0
    #allocation2 [shape = 'u8[4096]{0}', space=vmem, size = 0x1000, scoped, tag = 'output window, operand 0, single buffered']
    #allocation3 [shape = 's32[1]{0}', space=sflag, size = 0x4, scoped, tag = 'scoped memory for tpu_custom_call.1']
    %10 = vsyncpa [#allocation3], 0
    // Predicated region
    $region2: #{tpu_custom_call.1} parent=1 // pred_check
      _
    $region3: #{tpu_custom_call.1} parent=1 // pred_check_branch
      %12 = sbr.rel (0) target = $region5
    $region4: #{tpu_custom_call.1} parent=1 // pred_region
      _
    $region5: #{tpu_custom_call.1} parent=1 // pred_fallthru
      _
    // Predicated region
    $region6: #{tpu_custom_call.1} parent=1 // pred_check
      _
    $region7: #{tpu_custom_call.1} parent=1 // pred_check_branch
      %14 = sbr.rel (0) target = $region9
    $region8: #{tpu_custom_call.1} parent=1 // pred_region
      _
    $region9: #{tpu_custom_call.1} parent=1 // pred_fallthru
      _
    // Predicated region
    $region10: #{tpu_custom_call.1} parent=1 // pred_check
      _
    $region11: #{tpu_custom_call.1} parent=1 // pred_check_branch
      %16 = sbr.rel (0) target = $region13
    $region12: #{tpu_custom_call.1} parent=1 // pred_region
      _
    $region13: #{tpu_custom_call.1} parent=1 // pred_fallthru
      _
    // Predicated region
    $region14: #{tpu_custom_call.1} parent=1 // pred_check
      _
    $region15: #{tpu_custom_call.1} parent=1 // pred_check_branch
      %18 = sbr.rel (0) target = $region17
    $region16: #{tpu_custom_call.1} parent=1 // pred_region
      _
    $region17: #{tpu_custom_call.1} parent=1 // pred_fallthru
      _
    // Predicated region
    $region18: #{tpu_custom_call.1} parent=1 // pred_check
      _
    $region19: #{tpu_custom_call.1} parent=1 // pred_check_branch
      %20 = sbr.rel (0) target = $region21
    $region20: #{tpu_custom_call.1} parent=1 // pred_region
      _
    $region21: #{tpu_custom_call.1} parent=1 // pred_fallthru
      _
    %v21 = vld [vmem:[%s0] sm:$0xff]
    %v22 = vld [vmem:[%s1] sm:$0xff]
    %v23 = vld [vmem:[%s1 + $0x8] sm:$0xff]
    %v24 = vld [vmem:[%s1 + $0x10] sm:$0xff]
    %v25 = vld [vmem:[%s1 + $0x18] sm:$0xff]
    %v26 = vld [vmem:[%s2] sm:$0x1]
    %v28 = vlaneseq
    %v29 = vshrl.u32 %v28, 7
    %v30 = vsub.s32 0, %v29
    %v31 = vrot.slane %v26, %v30
    %vm33 = vcmask 261120
    %v35 = vsel %vm33, %v21, 0
    %v38 = vsel %vm33, %v22, 0
    %v41 = vsel %vm33, %v23, 0
    %v44 = vsel %vm33, %v24, 0
    %v47 = vsel %vm33, %v25, 0
    %49 = vmatprep.subr.mxu0 0.0
    %50 = vmatpush1.xpose.msra.mxu0 %v38
    %51 = vmatprep.subr.mxu0 0.0
    %52 = vmatpush1.xpose.msra.mxu0 %v41
    %53 = vmatprep.subr.mxu0 0.0
    %54 = vmatpush1.xpose.msra.mxu0 %v44
    %55 = vmatprep.subr.mxu0 0.0
    %56 = vmatpush1.xpose.msra.mxu0 %v47
    %57 = vmatprep.subr.mxu0 0.0
    %58 = vmatpush1.xpose.msra.mxu0 0.0
    %59 = vmatprep.subr.mxu0 0.0
    %60 = vmatpush1.xpose.msra.mxu0 0.0
    %61 = vmatprep.subr.mxu0 0.0
    %62 = vmatpush1.xpose.msra.mxu0 0.0
    %63 = vmatprep.subr.mxu0 0.0
    %64 = vmatpush1.xpose.msra.mxu0 0.0
    %65 = vmatprep.subr.mxu0 0.0
    %66 = vmatpush1.xpose.msra.mxu0 0.0
    %67 = vmatprep.subr.mxu0 0.0
    %68 = vmatpush1.xpose.msra.mxu0 0.0
    %69 = vmatprep.subr.mxu0 0.0
    %70 = vmatpush1.xpose.msra.mxu0 0.0
    %71 = vmatprep.subr.mxu0 0.0
    %72 = vmatpush1.xpose.msra.mxu0 0.0
    %73 = vmatprep.subr.mxu0 0.0
    %74 = vmatpush1.xpose.msra.mxu0 0.0
    %75 = vmatprep.subr.mxu0 0.0
    %76 = vmatpush1.xpose.msra.mxu0 0.0
    %77 = vmatprep.subr.mxu0 0.0
    %78 = vmatpush1.xpose.msra.mxu0 0.0
    %79 = vmatprep.subr.mxu0 0.0
    %80 = vmatpush1.xpose.msra.mxu0 0.0
    %81 = vmatprep.subr.mxu0 0.0
    %82 = vmatpush1.xpose.msra.mxu0 0.0
    %83 = vmatprep.subr.mxu0 0.0
    %84 = vmatpush1.xpose.msra.mxu0 0.0
    %85 = vmatprep.subr.mxu0 0.0
    %86 = vmatpush1.xpose.msra.mxu0 0.0
    %87 = vmatprep.subr.mxu0 0.0
    %88 = vmatpush1.xpose.msra.mxu0 0.0
    %89 = vmatprep.subr.mxu0 0.0
    %90 = vmatpush1.xpose.msra.mxu0 0.0
    %91 = vmatprep.subr.mxu0 0.0
    %92 = vmatpush1.xpose.msra.mxu0 0.0
    %93 = vmatprep.subr.mxu0 0.0
    %94 = vmatpush1.xpose.msra.mxu0 0.0
    %95 = vmatprep.subr.mxu0 0.0
    %96 = vmatpush1.xpose.msra.mxu0 0.0
    %97 = vmatprep.subr.mxu0 0.0
    %98 = vmatpush1.xpose.msra.mxu0 0.0
    %99 = vmatprep.subr.mxu0 0.0
    %100 = vmatpush1.xpose.msra.mxu0 0.0
    %101 = vmatprep.subr.mxu0 0.0
    %102 = vmatpush1.xpose.msra.mxu0 0.0
    %103 = vmatprep.subr.mxu0 0.0
    %104 = vmatpush1.xpose.msra.mxu0 0.0
    %105 = vmatprep.subr.mxu0 0.0
    %106 = vmatpush1.xpose.msra.mxu0 0.0
    %107 = vmatprep.subr.mxu0 0.0
    %108 = vmatpush1.xpose.msra.mxu0 0.0
    %109 = vmatprep.subr.mxu0 0.0
    %110 = vmatpush1.xpose.msra.mxu0 0.0
    %111 = vmatprep.subr.mxu0 0.0
    %112 = vmatpush1.xpose.msra.mxu0 0.0
    %113 = vmatprep.mubr.f32.mxu0 0.0
    %114 = vmatmul.mubr.f32.gmra.mrb[0].mxu0 %v35
    %v115 = vpop.f32.mrb[0].mxu0
    %v116 = vadd.f32 %v31, %v115
    %v117 = vpop.f32.mrb[0].mxu0
    %118 = vdwg.mxu0
    %v119 = vtanh.pop %v116
    %v120 = vld [vmem:[%s3] sm:$0xff]
    %v121 = vld [vmem:[%s3 + $0x8] sm:$0xff]
    %v122 = vld [vmem:[%s3 + $0x10] sm:$0xff]
    %v123 = vld [vmem:[%s3 + $0x18] sm:$0xff]
    %v124 = vld [vmem:[%s3 + $0x20] sm:$0xff]
    %v125 = vld [vmem:[%s3 + $0x28] sm:$0xff]
    %v126 = vld [vmem:[%s3 + $0x30] sm:$0xff]
    %v127 = vld [vmem:[%s3 + $0x38] sm:$0xff]
    %v128 = vld [vmem:[%s3 + $0x40] sm:$0xff]
    %v129 = vld [vmem:[%s3 + $0x48] sm:$0xff]
    %v130 = vld [vmem:[%s3 + $0x50] sm:$0xff]
    %v131 = vld [vmem:[%s3 + $0x58] sm:$0xff]
    %v132 = vld [vmem:[%s3 + $0x60] sm:$0xff]
    %v133 = vld [vmem:[%s3 + $0x68] sm:$0xff]
    %v134 = vld [vmem:[%s3 + $0x70] sm:$0xff]
    %v135 = vld [vmem:[%s3 + $0x78] sm:$0xff]
    %v136 = vld [vmem:[%s4] sm:$0x1]
    %v138 = vlaneseq
    %v139 = vshrl.u32 %v138, 7
    %v140 = vsub.s32 0, %v139
    %v141 = vrot.slane %v136, %v140
    %v144 = vsel %vm33, %v119, 0
    %v147 = vsel %vm33, %v120, 0
    %v150 = vsel %vm33, %v121, 0
    %v153 = vsel %vm33, %v122, 0
    %v156 = vsel %vm33, %v123, 0
    %v159 = vsel %vm33, %v124, 0
    %v162 = vsel %vm33, %v125, 0
    %v165 = vsel %vm33, %v126, 0
    %v168 = vsel %vm33, %v127, 0
    %v171 = vsel %vm33, %v128, 0
    %v174 = vsel %vm33, %v129, 0
    %v177 = vsel %vm33, %v130, 0
    %v180 = vsel %vm33, %v131, 0
    %v183 = vsel %vm33, %v132, 0
    %v186 = vsel %vm33, %v133, 0
    %v189 = vsel %vm33, %v134, 0
    %v192 = vsel %vm33, %v135, 0
    %194 = vmatprep.subr.mxu0 0.0
    %195 = vmatpush1.xpose.msra.mxu0 %v147
    %196 = vmatprep.subr.mxu0 0.0
    %197 = vmatpush1.xpose.msra.mxu0 %v150
    %198 = vmatprep.subr.mxu0 0.0
    %199 = vmatpush1.xpose.msra.mxu0 %v153
    %200 = vmatprep.subr.mxu0 0.0
    %201 = vmatpush1.xpose.msra.mxu0 %v156
    %202 = vmatprep.subr.mxu0 0.0
    %203 = vmatpush1.xpose.msra.mxu0 %v159
    %204 = vmatprep.subr.mxu0 0.0
    %205 = vmatpush1.xpose.msra.mxu0 %v162
    %206 = vmatprep.subr.mxu0 0.0
    %207 = vmatpush1.xpose.msra.mxu0 %v165
    %208 = vmatprep.subr.mxu0 0.0
    %209 = vmatpush1.xpose.msra.mxu0 %v168
    %210 = vmatprep.subr.mxu0 0.0
    %211 = vmatpush1.xpose.msra.mxu0 %v171
    %212 = vmatprep.subr.mxu0 0.0
    %213 = vmatpush1.xpose.msra.mxu0 %v174
    %214 = vmatprep.subr.mxu0 0.0
    %215 = vmatpush1.xpose.msra.mxu0 %v177
    %216 = vmatprep.subr.mxu0 0.0
    %217 = vmatpush1.xpose.msra.mxu0 %v180
    %218 = vmatprep.subr.mxu0 0.0
    %219 = vmatpush1.xpose.msra.mxu0 %v183
    %220 = vmatprep.subr.mxu0 0.0
    %221 = vmatpush1.xpose.msra.mxu0 %v186
    %222 = vmatprep.subr.mxu0 0.0
    %223 = vmatpush1.xpose.msra.mxu0 %v189
    %224 = vmatprep.subr.mxu0 0.0
    %225 = vmatpush1.xpose.msra.mxu0 %v192
    %226 = vmatprep.subr.mxu0 0.0
    %227 = vmatpush1.xpose.msra.mxu0 0.0
    %228 = vmatprep.subr.mxu0 0.0
    %229 = vmatpush1.xpose.msra.mxu0 0.0
    %230 = vmatprep.subr.mxu0 0.0
    %231 = vmatpush1.xpose.msra.mxu0 0.0
    %232 = vmatprep.subr.mxu0 0.0
    %233 = vmatpush1.xpose.msra.mxu0 0.0
    %234 = vmatprep.subr.mxu0 0.0
    %235 = vmatpush1.xpose.msra.mxu0 0.0
    %236 = vmatprep.subr.mxu0 0.0
    %237 = vmatpush1.xpose.msra.mxu0 0.0
    %238 = vmatprep.subr.mxu0 0.0
    %239 = vmatpush1.xpose.msra.mxu0 0.0
    %240 = vmatprep.subr.mxu0 0.0
    %241 = vmatpush1.xpose.msra.mxu0 0.0
    %242 = vmatprep.subr.mxu0 0.0
    %243 = vmatpush1.xpose.msra.mxu0 0.0
    %244 = vmatprep.subr.mxu0 0.0
    %245 = vmatpush1.xpose.msra.mxu0 0.0
    %246 = vmatprep.subr.mxu0 0.0
    %247 = vmatpush1.xpose.msra.mxu0 0.0
    %248 = vmatprep.subr.mxu0 0.0
    %249 = vmatpush1.xpose.msra.mxu0 0.0
    %250 = vmatprep.subr.mxu0 0.0
    %251 = vmatpush1.xpose.msra.mxu0 0.0
    %252 = vmatprep.subr.mxu0 0.0
    %253 = vmatpush1.xpose.msra.mxu0 0.0
    %254 = vmatprep.subr.mxu0 0.0
    %255 = vmatpush1.xpose.msra.mxu0 0.0
    %256 = vmatprep.subr.mxu0 0.0
    %257 = vmatpush1.xpose.msra.mxu0 0.0
    %258 = vmatprep.mubr.f32.mxu0 0.0
    %259 = vmatmul.mubr.f32.gmra.mrb[0].mxu0 %v144
    %v260 = vpop.f32.mrb[0].mxu0
    %v261 = vadd.f32 %v141, %v260
    %v262 = vpop.f32.mrb[0].mxu0
    %263 = vdwg.mxu0
    %264 = vst [vmem:[#allocation2] sm:$0xff] %v261
    // Predicated region
    $region22: #{tpu_custom_call.1} parent=1 // pred_check
      _
    $region23: #{tpu_custom_call.1} parent=1 // pred_check_branch
      %266 = sbr.rel (0) target = $region25
    $region24: #{tpu_custom_call.1} parent=1 // pred_region
      %s268 = ssub.s32 128, 128
      %269 = vsyncadd [#allocation3], %s268
      %s271 = sshll.u32 [#allocation2], 4
      %s272 = int_to_ptr.vmem [resolvable:$true] %s271
      %274 = dma.vmem_to_hbm [thread:$0]  %s272, 128, %s5, [#allocation3]
    $region25: #{tpu_custom_call.1} parent=1 // pred_fallthru
      _
    // Predicated region
    $region26: #{tpu_custom_call.1} parent=1 // pred_check
      _
    $region27: #{tpu_custom_call.1} parent=1 // pred_check_branch
      %276 = sbr.rel (0) target = $region29
    $region28: #{tpu_custom_call.1} parent=1 // pred_region
      %277 = dma.done [#allocation3], 128
    $region29: #{tpu_custom_call.1} parent=1 // pred_fallthru
      _
    %278 = vsyncpa [#allocation3], 1

// kernel: tpu_custom_call.1
$region0: #{tpu_custom_call.1}
  #allocation0 [shape = 'u32[]', space=smem, size = 0x4, offset = 0x4, fixed_abs, tag = 'smem constant byte address 0x4 - core index']
  #allocation1 [shape = 'u32[144,128]{1,0:T(1,128)}', space=vmem, size = 0x12000, scoped, tag = 'internal scratch']
  %s0 = inlined_call_operand.vmem [shape: f32[8,32], index: 0, kind: input, shape index: {}]
  %s1 = inlined_call_operand.vmem [shape: f32[32,32], index: 1, kind: input, shape index: {}]
  %s2 = inlined_call_operand.vmem [shape: f32[1,32], index: 2, kind: input, shape index: {}]
  %s3 = inlined_call_operand.vmem [shape: f32[128,32], index: 3, kind: input, shape index: {}]
  %s4 = inlined_call_operand.vmem [shape: f32[1,128], index: 4, kind: input, shape index: {}]
  %s5 = inlined_call_operand.hbm [shape: f32[8,128], index: 5, kind: output, shape index: {}]
  %s6 = sld [smem:[#allocation0]]
  $region30: #{tpu_custom_call.1} parent=0
    _
  %s8 = ssub.s32 1, %s6
  %s9 = scalar_select 0, %s8, %s6
  $region1: #{tpu_custom_call.1} parent=0
    #allocation2 [shape = 'u8[4096]{0}', space=vmem, size = 0x1000, scoped, tag = 'output window, operand 0, single buffered']
    #allocation3 [shape = 's32[1]{0}', space=sflag, size = 0x4, scoped, tag = 'scoped memory for tpu_custom_call.1']
    %10 = vsyncpa [#allocation3], 0
    // Predicated region
    $region2: #{tpu_custom_call.1} parent=1 // pred_check
      _
    $region3: #{tpu_custom_call.1} parent=1 // pred_check_branch
      %12 = sbr.rel (0) target = $region5
    $region4: #{tpu_custom_call.1} parent=1 // pred_region
      _
    $region5: #{tpu_custom_call.1} parent=1 // pred_fallthru
      _
    // Predicated region
    $region6: #{tpu_custom_call.1} parent=1 // pred_check
      _
    $region7: #{tpu_custom_call.1} parent=1 // pred_check_branch
      %14 = sbr.rel (0) target = $region9
    $region8: #{tpu_custom_call.1} parent=1 // pred_region
      _
    $region9: #{tpu_custom_call.1} parent=1 // pred_fallthru
      _
    // Predicated region
    $region10: #{tpu_custom_call.1} parent=1 // pred_check
      _
    $region11: #{tpu_custom_call.1} parent=1 // pred_check_branch
      %16 = sbr.rel (0) target = $region13
    $region12: #{tpu_custom_call.1} parent=1 // pred_region
      _
    $region13: #{tpu_custom_call.1} parent=1 // pred_fallthru
      _
    // Predicated region
    $region14: #{tpu_custom_call.1} parent=1 // pred_check
      _
    $region15: #{tpu_custom_call.1} parent=1 // pred_check_branch
      %18 = sbr.rel (0) target = $region17
    $region16: #{tpu_custom_call.1} parent=1 // pred_region
      _
    $region17: #{tpu_custom_call.1} parent=1 // pred_fallthru
      _
    // Predicated region
    $region18: #{tpu_custom_call.1} parent=1 // pred_check
      _
    $region19: #{tpu_custom_call.1} parent=1 // pred_check_branch
      %20 = sbr.rel (0) target = $region21
    $region20: #{tpu_custom_call.1} parent=1 // pred_region
      _
    $region21: #{tpu_custom_call.1} parent=1 // pred_fallthru
      _
    %v21 = vld [vmem:[%s0] sm:$0xff]
    %v22 = vld [vmem:[%s1] sm:$0xff]
    %v23 = vld [vmem:[%s1 + $0x8] sm:$0xff]
    %v24 = vld [vmem:[%s1 + $0x10] sm:$0xff]
    %v25 = vld [vmem:[%s1 + $0x18] sm:$0xff]
    %v26 = vld [vmem:[%s2] sm:$0x1]
    %v28 = vlaneseq
    %v29 = vshrl.u32 %v28, 7
    %v30 = vsub.s32 0, %v29
    %v31 = vrot.slane %v26, %v30
    %vm33 = vcmask 261120
    %v35 = vsel %vm33, %v21, 0
    %v38 = vsel %vm33, %v22, 0
    %v41 = vsel %vm33, %v23, 0
    %v44 = vsel %vm33, %v24, 0
    %v47 = vsel %vm33, %v25, 0
    %49 = vmatprep.subr.mxu0 0.0
    %50 = vmatpush1.xpose.msra.mxu0 %v38
    %51 = vmatprep.subr.mxu0 0.0
    %52 = vmatpush1.xpose.msra.mxu0 %v41
    %53 = vmatprep.subr.mxu0 0.0
    %54 = vmatpush1.xpose.msra.mxu0 %v44
    %55 = vmatprep.subr.mxu0 0.0
    %56 = vmatpush1.xpose.msra.mxu0 %v47
    %57 = vmatprep.subr.mxu0 0.0
    %58 = vmatpush1.xpose.msra.mxu0 0.0
    %59 = vmatprep.subr.mxu0 0.0
    %60 = vmatpush1.xpose.msra.mxu0 0.0
    %61 = vmatprep.subr.mxu0 0.0
    %62 = vmatpush1.xpose.msra.mxu0 0.0
    %63 = vmatprep.subr.mxu0 0.0
    %64 = vmatpush1.xpose.msra.mxu0 0.0
    %65 = vmatprep.subr.mxu0 0.0
    %66 = vmatpush1.xpose.msra.mxu0 0.0
    %67 = vmatprep.subr.mxu0 0.0
    %68 = vmatpush1.xpose.msra.mxu0 0.0
    %69 = vmatprep.subr.mxu0 0.0
    %70 = vmatpush1.xpose.msra.mxu0 0.0
    %71 = vmatprep.subr.mxu0 0.0
    %72 = vmatpush1.xpose.msra.mxu0 0.0
    %73 = vmatprep.subr.mxu0 0.0
    %74 = vmatpush1.xpose.msra.mxu0 0.0
    %75 = vmatprep.subr.mxu0 0.0
    %76 = vmatpush1.xpose.msra.mxu0 0.0
    %77 = vmatprep.subr.mxu0 0.0
    %78 = vmatpush1.xpose.msra.mxu0 0.0
    %79 = vmatprep.subr.mxu0 0.0
    %80 = vmatpush1.xpose.msra.mxu0 0.0
    %81 = vmatprep.subr.mxu0 0.0
    %82 = vmatpush1.xpose.msra.mxu0 0.0
    %83 = vmatprep.subr.mxu0 0.0
    %84 = vmatpush1.xpose.msra.mxu0 0.0
    %85 = vmatprep.subr.mxu0 0.0
    %86 = vmatpush1.xpose.msra.mxu0 0.0
    %87 = vmatprep.subr.mxu0 0.0
    %88 = vmatpush1.xpose.msra.mxu0 0.0
    %89 = vmatprep.subr.mxu0 0.0
    %90 = vmatpush1.xpose.msra.mxu0 0.0
    %91 = vmatprep.subr.mxu0 0.0
    %92 = vmatpush1.xpose.msra.mxu0 0.0
    %93 = vmatprep.subr.mxu0 0.0
    %94 = vmatpush1.xpose.msra.mxu0 0.0
    %95 = vmatprep.subr.mxu0 0.0
    %96 = vmatpush1.xpose.msra.mxu0 0.0
    %97 = vmatprep.subr.mxu0 0.0
    %98 = vmatpush1.xpose.msra.mxu0 0.0
    %99 = vmatprep.subr.mxu0 0.0
    %100 = vmatpush1.xpose.msra.mxu0 0.0
    %101 = vmatprep.subr.mxu0 0.0
    %102 = vmatpush1.xpose.msra.mxu0 0.0
    %103 = vmatprep.subr.mxu0 0.0
    %104 = vmatpush1.xpose.msra.mxu0 0.0
    %105 = vmatprep.subr.mxu0 0.0
    %106 = vmatpush1.xpose.msra.mxu0 0.0
    %107 = vmatprep.subr.mxu0 0.0
    %108 = vmatpush1.xpose.msra.mxu0 0.0
    %109 = vmatprep.subr.mxu0 0.0
    %110 = vmatpush1.xpose.msra.mxu0 0.0
    %111 = vmatprep.subr.mxu0 0.0
    %112 = vmatpush1.xpose.msra.mxu0 0.0
    %113 = vmatprep.mubr.f32.mxu0 0.0
    %114 = vmatmul.mubr.f32.gmra.mrb[0].mxu0 %v35
    %v115 = vpop.f32.mrb[0].mxu0
    %v116 = vadd.f32 %v31, %v115
    %v117 = vpop.f32.mrb[0].mxu0
    %118 = vdwg.mxu0
    %v119 = vtanh.pop %v116
    %v120 = vld [vmem:[%s3] sm:$0xff]
    %v121 = vld [vmem:[%s3 + $0x8] sm:$0xff]
    %v122 = vld [vmem:[%s3 + $0x10] sm:$0xff]
    %v123 = vld [vmem:[%s3 + $0x18] sm:$0xff]
    %v124 = vld [vmem:[%s3 + $0x20] sm:$0xff]
    %v125 = vld [vmem:[%s3 + $0x28] sm:$0xff]
    %v126 = vld [vmem:[%s3 + $0x30] sm:$0xff]
    %v127 = vld [vmem:[%s3 + $0x38] sm:$0xff]
    %v128 = vld [vmem:[%s3 + $0x40] sm:$0xff]
    %v129 = vld [vmem:[%s3 + $0x48] sm:$0xff]
    %v130 = vld [vmem:[%s3 + $0x50] sm:$0xff]
    %v131 = vld [vmem:[%s3 + $0x58] sm:$0xff]
    %v132 = vld [vmem:[%s3 + $0x60] sm:$0xff]
    %v133 = vld [vmem:[%s3 + $0x68] sm:$0xff]
    %v134 = vld [vmem:[%s3 + $0x70] sm:$0xff]
    %v135 = vld [vmem:[%s3 + $0x78] sm:$0xff]
    %v136 = vld [vmem:[%s4] sm:$0x1]
    %v138 = vlaneseq
    %v139 = vshrl.u32 %v138, 7
    %v140 = vsub.s32 0, %v139
    %v141 = vrot.slane %v136, %v140
    %v144 = vsel %vm33, %v119, 0
    %v147 = vsel %vm33, %v120, 0
    %v150 = vsel %vm33, %v121, 0
    %v153 = vsel %vm33, %v122, 0
    %v156 = vsel %vm33, %v123, 0
    %v159 = vsel %vm33, %v124, 0
    %v162 = vsel %vm33, %v125, 0
    %v165 = vsel %vm33, %v126, 0
    %v168 = vsel %vm33, %v127, 0
    %v171 = vsel %vm33, %v128, 0
    %v174 = vsel %vm33, %v129, 0
    %v177 = vsel %vm33, %v130, 0
    %v180 = vsel %vm33, %v131, 0
    %v183 = vsel %vm33, %v132, 0
    %v186 = vsel %vm33, %v133, 0
    %v189 = vsel %vm33, %v134, 0
    %v192 = vsel %vm33, %v135, 0
    %194 = vmatprep.subr.mxu0 0.0
    %195 = vmatpush1.xpose.msra.mxu0 %v147
    %196 = vmatprep.subr.mxu0 0.0
    %197 = vmatpush1.xpose.msra.mxu0 %v150
    %198 = vmatprep.subr.mxu0 0.0
    %199 = vmatpush1.xpose.msra.mxu0 %v153
    %200 = vmatprep.subr.mxu0 0.0
    %201 = vmatpush1.xpose.msra.mxu0 %v156
    %202 = vmatprep.subr.mxu0 0.0
    %203 = vmatpush1.xpose.msra.mxu0 %v159
    %204 = vmatprep.subr.mxu0 0.0
    %205 = vmatpush1.xpose.msra.mxu0 %v162
    %206 = vmatprep.subr.mxu0 0.0
    %207 = vmatpush1.xpose.msra.mxu0 %v165
    %208 = vmatprep.subr.mxu0 0.0
    %209 = vmatpush1.xpose.msra.mxu0 %v168
    %210 = vmatprep.subr.mxu0 0.0
    %211 = vmatpush1.xpose.msra.mxu0 %v171
    %212 = vmatprep.subr.mxu0 0.0
    %213 = vmatpush1.xpose.msra.mxu0 %v174
    %214 = vmatprep.subr.mxu0 0.0
    %215 = vmatpush1.xpose.msra.mxu0 %v177
    %216 = vmatprep.subr.mxu0 0.0
    %217 = vmatpush1.xpose.msra.mxu0 %v180
    %218 = vmatprep.subr.mxu0 0.0
    %219 = vmatpush1.xpose.msra.mxu0 %v183
    %220 = vmatprep.subr.mxu0 0.0
    %221 = vmatpush1.xpose.msra.mxu0 %v186
    %222 = vmatprep.subr.mxu0 0.0
    %223 = vmatpush1.xpose.msra.mxu0 %v189
    %224 = vmatprep.subr.mxu0 0.0
    %225 = vmatpush1.xpose.msra.mxu0 %v192
    %226 = vmatprep.subr.mxu0 0.0
    %227 = vmatpush1.xpose.msra.mxu0 0.0
    %228 = vmatprep.subr.mxu0 0.0
    %229 = vmatpush1.xpose.msra.mxu0 0.0
    %230 = vmatprep.subr.mxu0 0.0
    %231 = vmatpush1.xpose.msra.mxu0 0.0
    %232 = vmatprep.subr.mxu0 0.0
    %233 = vmatpush1.xpose.msra.mxu0 0.0
    %234 = vmatprep.subr.mxu0 0.0
    %235 = vmatpush1.xpose.msra.mxu0 0.0
    %236 = vmatprep.subr.mxu0 0.0
    %237 = vmatpush1.xpose.msra.mxu0 0.0
    %238 = vmatprep.subr.mxu0 0.0
    %239 = vmatpush1.xpose.msra.mxu0 0.0
    %240 = vmatprep.subr.mxu0 0.0
    %241 = vmatpush1.xpose.msra.mxu0 0.0
    %242 = vmatprep.subr.mxu0 0.0
    %243 = vmatpush1.xpose.msra.mxu0 0.0
    %244 = vmatprep.subr.mxu0 0.0
    %245 = vmatpush1.xpose.msra.mxu0 0.0
    %246 = vmatprep.subr.mxu0 0.0
    %247 = vmatpush1.xpose.msra.mxu0 0.0
    %248 = vmatprep.subr.mxu0 0.0
    %249 = vmatpush1.xpose.msra.mxu0 0.0
    %250 = vmatprep.subr.mxu0 0.0
    %251 = vmatpush1.xpose.msra.mxu0 0.0
    %252 = vmatprep.subr.mxu0 0.0
    %253 = vmatpush1.xpose.msra.mxu0 0.0
    %254 = vmatprep.subr.mxu0 0.0
    %255 = vmatpush1.xpose.msra.mxu0 0.0
    %256 = vmatprep.subr.mxu0 0.0
    %257 = vmatpush1.xpose.msra.mxu0 0.0
    %258 = vmatprep.mubr.f32.mxu0 0.0
    %259 = vmatmul.mubr.f32.gmra.mrb[0].mxu0 %v144
    %v260 = vpop.f32.mrb[0].mxu0
    %v261 = vadd.f32 %v141, %v260
    %v262 = vpop.f32.mrb[0].mxu0
    %263 = vdwg.mxu0
    %264 = vst [vmem:[#allocation2] sm:$0xff] %v261
    // Predicated region
    $region22: #{tpu_custom_call.1} parent=1 // pred_check
      _
    $region23: #{tpu_custom_call.1} parent=1 // pred_check_branch
      %266 = sbr.rel (0) target = $region25
    $region24: #{tpu_custom_call.1} parent=1 // pred_region
      %s268 = ssub.s32 128, 128
      %269 = vsyncadd [#allocation3], %s268
      %s271 = sshll.u32 [#allocation2], 4
      %s272 = int_to_ptr.vmem [resolvable:$true] %s271
      %274 = dma.vmem_to_hbm [thread:$0]  %s272, 128, %s5, [#allocation3]
    $region25: #{tpu_custom_call.1} parent=1 // pred_fallthru
      _
    // Predicated region
    $region26: #{tpu_custom_call.1} parent=1 // pred_check
      _
    $region27: #{tpu_custom_call.1} parent=1 // pred_check_branch
      %276 = sbr.rel (0) target = $region29
    $region28: #{tpu_custom_call.1} parent=1 // pred_region
      %277 = dma.done [#allocation3], 128
    $region29: #{tpu_custom_call.1} parent=1 // pred_fallthru
      _
    %278 = vsyncpa [#allocation3], 1

</llo_original>
